<compile_context>
chip_gen: v5e
topology: v5e:2x2
jax: 0.10.0
libtpu: 0.0.40
codegen_flags: <defaults>
</compile_context>

<pallas_src>
import jax
import jax.numpy as jnp
from jax.experimental import pallas as pl
from jax.experimental.pallas import tpu as pltpu

_LANE = 128
_SUBLANE = 8


# ----------------------------------------------------------------------------
# Scalar kernel: one confusion matrix (SMEM-only, launch-overhead bound).
# ----------------------------------------------------------------------------
def _precision_scalar_kernel(cm_ref, out_ref):
    # cm_ref:  (4,) SMEM, ravel order tn, fp, fn, tp.
    # out_ref: (1,) float32 SMEM.
    fp = cm_ref[1]
    tp = cm_ref[3]
    denom = fp + tp                                   # exact for int inputs
    tp_f = tp.astype(jnp.float32)
    denom_f = jnp.maximum(denom, 1).astype(jnp.float32)
    out_ref[0] = jnp.where(denom > 0, tp_f / denom_f, jnp.float32(0.0))


def bi_cls_precision(confusion_matrix: jax.Array) -> jax.Array:
    """Precision from a single (2, 2) confusion matrix [[tn, fp], [fn, tp]].

    Returns a (1,) float32 array: tp / (fp + tp), or 0.0 if fp + tp == 0.
    """
    cm_flat = confusion_matrix.reshape(4)
    return pl.pallas_call(
        _precision_scalar_kernel,
        out_shape=jax.ShapeDtypeStruct((1,), jnp.float32),
        in_specs=[pl.BlockSpec(memory_space=pltpu.SMEM)],
        out_specs=pl.BlockSpec(memory_space=pltpu.SMEM),
    )(cm_flat)


# ----------------------------------------------------------------------------
# Batched kernel: N confusion matrices in one (usually single-step) call.
# Inputs are the fp and tp fields only, laid out as (rows, 128) slabs with
# rows a multiple of 8 -> full-width vregs, lane-dense output stores.
# ----------------------------------------------------------------------------
def _precision_batched_kernel(fp_ref, tp_ref, out_ref):
    fp = fp_ref[...]
    tp = tp_ref[...]
    denom = fp + tp                                   # exact for int counts
    tp_f = tp.astype(jnp.float32)
    denom_f = denom.astype(jnp.float32)
    out_ref[...] = jnp.where(
        denom > 0, tp_f / jnp.maximum(denom_f, jnp.float32(1.0)),
        jnp.float32(0.0))


def bi_cls_precision_batched(confusion_matrices: jax.Array,
                             *, max_block_rows: int = 2048) -> jax.Array:
    """Precision for a batch of (N, 2, 2) confusion matrices -> (N,) float32.

    max_block_rows (multiple of 8): rows of 128 lanes per grid step. The
    default (2048) covers N <= 262,144 in a single grid step (~6 MiB of
    double-buffered VMEM), well under the scoped VMEM default on v5e/v6e/v7x.
    """
    cms = confusion_matrices.reshape(-1, 4)           # (N, 4): tn, fp, fn, tp
    n = cms.shape[0]

    # Slice fp/tp FIRST: every later pad/reshape pass then moves half the bytes,
    # and the kernel never DMAs the unused tn/fn fields at all.
    fp = cms[:, 1]
    tp = cms[:, 3]

    # Pad so the 2-D view is (rows, 128) with rows a multiple of 8.
    chunk = _LANE * _SUBLANE                          # 1024
    n_pad = chunk * pl.cdiv(n, chunk)
    rows = n_pad // _LANE
    if rows > max_block_rows:                         # huge batches: multi-step
        rows = max_block_rows * pl.cdiv(rows, max_block_rows)
        n_pad = rows * _LANE
    block_rows = min(rows, max_block_rows)
    grid_n = rows // block_rows

    if n_pad != n:                                    # padded lanes -> denom 0 -> 0.0
        fp = jnp.pad(fp, (0, n_pad - n))
        tp = jnp.pad(tp, (0, n_pad - n))
    fp2 = fp.reshape(rows, _LANE)
    tp2 = tp.reshape(rows, _LANE)

    out = pl.pallas_call(
        _precision_batched_kernel,
        out_shape=jax.ShapeDtypeStruct((rows, _LANE), jnp.float32),
        grid=(grid_n,),
        in_specs=[pl.BlockSpec((block_rows, _LANE), lambda i: (i, 0)),
                  pl.BlockSpec((block_rows, _LANE), lambda i: (i, 0))],
        out_specs=pl.BlockSpec((block_rows, _LANE), lambda i: (i, 0)),
        compiler_params=pltpu.CompilerParams(
            dimension_semantics=("parallel",)),       # shards across TCs on v7x
    )(fp2, tp2)
    return out.reshape(n_pad)[:n]


if __name__ == "__main__":
    key = jax.random.PRNGKey(0)

    # --- scalar path -------------------------------------------------------
    cm = jax.random.randint(key, (2, 2), minval=0, maxval=50, dtype=jnp.int32)
    result = bi_cls_precision(cm)
    jax.block_until_ready(result)

    tn, fp_v, fn, tp_v = [x.astype(jnp.float32) for x in jnp.ravel(cm)]
    expected = jnp.where(fp_v + tp_v > 0,
                         tp_v / jnp.maximum(fp_v + tp_v, 1.0), 0.0)
    assert jnp.allclose(result[0], expected, rtol=1e-6, atol=1e-6), (
        result, expected)

    # Degenerate branch (fp + tp == 0) -> 0.0, matching torch.Tensor([0.0]).
    cm_zero = jnp.array([[5, 0], [3, 0]], dtype=jnp.int32)
    result_zero = bi_cls_precision(cm_zero)
    jax.block_until_ready(result_zero)
    assert jnp.allclose(result_zero[0], 0.0), result_zero

    # --- batched path (small N; exercises pad path, single grid step) -------
    cms = jax.random.randint(jax.random.PRNGKey(0), (8, 2, 2),
                             minval=0, maxval=50, dtype=jnp.int32)
    batched = bi_cls_precision_batched(cms)
    jax.block_until_ready(batched)

    flat = cms.reshape(8, 4).astype(jnp.float32)
    denom_ref = flat[:, 1] + flat[:, 3]
    expected_b = jnp.where(denom_ref > 0,
                           flat[:, 3] / jnp.maximum(denom_ref, 1.0), 0.0)
    assert jnp.allclose(batched, expected_b, rtol=1e-6, atol=1e-6), (
        batched, expected_b)

    print("KERNEL_OK")
</pallas_src>

<mosaic_0001>
module attributes {stable_mosaic.version = 11 : i64} {
  func.func @_precision_scalar_kernel(%arg0: memref<4xi32, #tpu.memory_space<smem>>, %arg1: memref<1xf32, #tpu.memory_space<smem>>) attributes {dimension_semantics = [], scalar_prefetch = 0 : i64, scratch_operands = 0 : i64, tpu.core_type = #tpu.core_type<tc>} {
    %c1 = arith.constant 1 : index
    %0 = memref.load %arg0[%c1] : memref<4xi32, #tpu.memory_space<smem>>
    %c3 = arith.constant 3 : index
    %1 = memref.load %arg0[%c3] : memref<4xi32, #tpu.memory_space<smem>>
    %2 = arith.addi %0, %1 : i32
    %3 = arith.sitofp %1 : i32 to f32
    %c1_i32 = arith.constant 1 : i32
    %4 = arith.maxsi %2, %c1_i32 : i32
    %5 = arith.sitofp %4 : i32 to f32
    %c0_i32 = arith.constant 0 : i32
    %6 = arith.cmpi sgt, %2, %c0_i32 : i32
    %7 = arith.divf %3, %5 : f32
    %cst = arith.constant 0.000000e+00 : f32
    %8 = arith.select %6, %7, %cst : f32
    %c0 = arith.constant 0 : index
    %9 = memref.load %arg1[%c0] : memref<1xf32, #tpu.memory_space<smem>>
    memref.store %8, %arg1[%c0] : memref<1xf32, #tpu.memory_space<smem>>
    return
  }
}

</mosaic_0001>

<llo_original>
// kernel: tpu_custom_call.1
$region0: #{tpu_custom_call.1}
  #allocation0 [shape = 'u32[]', space=smem, size = 0x4, offset = 0x4, fixed_abs, tag = 'smem constant byte address 0x4 - core index']
  #allocation1 [shape = 'u32[72,128]{1,0:T(1,128)}', space=vmem, size = 0x9000, scoped, tag = 'internal scratch']
  %s0 = inlined_call_operand.hbm [shape: s32[4], index: 0, kind: input, shape index: {}]
  %s1 = inlined_call_operand.hbm [shape: f32[1], index: 1, kind: output, shape index: {}]
  %s2 = sld [smem:[#allocation0]]
  $region18: #{tpu_custom_call.1} parent=0
    _
  %s4 = ssub.s32 1, %s2
  %s5 = scalar_select 0, %s4, %s2
  $region1: #{tpu_custom_call.1} parent=0
    #allocation2 [shape = 'u8[512]{0}', space=smem, size = 0x200, scoped, tag = 'input window, operand 0, single buffered']
    #allocation3 [shape = 's32[1]{0}', space=sflag, size = 0x4, scoped, tag = 'scoped memory for tpu_custom_call.1']
    #allocation4 [shape = 's32[1]{0}', space=sflag, size = 0x4, scoped, tag = 'scoped memory for tpu_custom_call.1']
    #allocation5 [shape = 'u8[512]{0}', space=smem, size = 0x200, scoped, tag = 'output window, operand 0, single buffered']
    %6 = vsyncpa [#allocation3], 0
    %7 = vsyncpa [#allocation4], 0
    // Predicated region
    $region2: #{tpu_custom_call.1} parent=1 // pred_check
      _
    $region3: #{tpu_custom_call.1} parent=1 // pred_check_branch
      %9 = sbr.rel (0) target = $region5
    $region4: #{tpu_custom_call.1} parent=1 // pred_region
      %11 = vsyncadd [#allocation3], 0
      %s13 = sshll.u32 %s0, 4
      %s14 = int_to_ptr.hbm [resolvable:$true] %s13
      %16 = dma.hbm_to_smem %s14, 16, [#allocation2], [#allocation3]
    $region5: #{tpu_custom_call.1} parent=1 // pred_fallthru
      _
    // Predicated region
    $region6: #{tpu_custom_call.1} parent=1 // pred_check
      _
    $region7: #{tpu_custom_call.1} parent=1 // pred_check_branch
      %18 = sbr.rel (0) target = $region9
    $region8: #{tpu_custom_call.1} parent=1 // pred_region
      %20 = dma.done [#allocation3], 16
    $region9: #{tpu_custom_call.1} parent=1 // pred_fallthru
      _
    %21 = sfence
    %s22 = sld [smem:[#allocation2 + $0x1]]
    %s23 = sld [smem:[#allocation2 + $0x3]]
    %s24 = sadd.s32 %s22, %s23
    %s25 = scvt.s32.f32 %s23
    %p26 = scmp.gt.s32.totalorder %s24, 1
    %s27 = scalar_select %p26, %s24, 1
    %s28 = scvt.s32.f32 %s27
    %p29 = scmp.gt.s32.totalorder %s24, 0
    %v30 = vstv %s28
    %v31 = vrcp.pop %v30
    %v32 = vmul.f32 %v30, %v31
    %v33 = vsub.f32 1.0, %v32
    %v34 = vmul.f32 %v31, %v33
    %v35 = vadd.f32 %v31, %v34
    %vm36 = vweird.f32 %v30
    %vm37 = vweird.f32 %v31
    %vm38 = vmor %vm36, %vm37
    %v39 = vsel %vm38, %v31, %v35
    %v40 = vand.u32 2147483647, %v30
    %vm41 = vcmp.eq.f32.partialorder %v40, 8.507059e+37
    %v42 = vand.u32 %v30, 2147483648
    %v43 = vor.u32 1.1754944e-38, %v42
    %v44 = vsel %vm41, %v43, %v39
    %s45 = vtos %v44
    %s46 = smul.f32 %s25, %s45
    %s47 = scalar_select %p29, %s46, 0.0
    %s48 = scalar_lea.smem [#allocation5], 0
    %49 = sst [smem:[%s48]] %s47
    // Predicated region
    $region10: #{tpu_custom_call.1} parent=1 // pred_check
      _
    $region11: #{tpu_custom_call.1} parent=1 // pred_check_branch
      %51 = sbr.rel (0) target = $region13
    $region12: #{tpu_custom_call.1} parent=1 // pred_region
      %53 = vsyncadd [#allocation4], 0
      %s55 = sshll.u32 %s1, 4
      %s56 = int_to_ptr.hbm [resolvable:$true] %s55
      %58 = dma.smem_to_hbm [#allocation5], 16, %s56, [#allocation4]
    $region13: #{tpu_custom_call.1} parent=1 // pred_fallthru
      _
    // Predicated region
    $region14: #{tpu_custom_call.1} parent=1 // pred_check
      _
    $region15: #{tpu_custom_call.1} parent=1 // pred_check_branch
      %60 = sbr.rel (0) target = $region17
    $region16: #{tpu_custom_call.1} parent=1 // pred_region
      %62 = dma.done [#allocation4], 16
    $region17: #{tpu_custom_call.1} parent=1 // pred_fallthru
      _
    %63 = sfence
    %64 = vsyncpa [#allocation3], 1
    %65 = vsyncpa [#allocation4], 1

</llo_original>
